<compile_context>
chip_gen: v7x
topology: tpu7x:2x2x1
jax: 0.10.0
libtpu: 0.0.40
codegen_flags: <defaults>
</compile_context>

<pallas_src>
import jax
import jax.numpy as jnp
from jax.experimental import pallas as pl
from jax.experimental.pallas import tpu as pltpu

N_CLASS = 20


def _teacher_fused_kernel(affine_ref, xw_ref, w_ref, b_ref, out_ref):
    # affine (SMEM, scalar-prefetch): [a1, c1, a2, c2] with
    #   a1 = w1 + wr1, c1 = b1 + br1, a2 = w2 + wr2, c2 = b2 + br2
    a1 = affine_ref[0]
    c1 = affine_ref[1]
    a2 = affine_ref[2]
    c2 = affine_ref[3]

    # Stage 1: affine + ReLU + MaxPool2d(2,2) over (di, dj)
    # Stage 2: affine + ReLU + MaxPool2d(2,2) over (ei, ej)
    feat = None
    for ei in range(2):
        for ej in range(2):
            m1 = None
            for di in range(2):
                for dj in range(2):
                    k = 8 * ei + 4 * di + 2 * ej + dj
                    v = jnp.maximum(a1 * xw_ref[k] + c1, 0.0)      # (bb, 72)
                    m1 = v if m1 is None else jnp.maximum(m1, v)
            y = jnp.maximum(a2 * m1 + c2, 0.0)
            feat = y if feat is None else jnp.maximum(feat, y)      # (bb, 72)

    # Fused Linear(72, 20) + Softmax(dim=1) — features never leave VMEM.
    logits = jnp.dot(feat, w_ref[...],
                     preferred_element_type=jnp.float32) + b_ref[...]
    m = jnp.max(logits, axis=-1, keepdims=True)
    e = jnp.exp(logits - m)
    s = jnp.sum(e, axis=-1, keepdims=True)
    out_ref[...] = e * pl.reciprocal(s, approx=False)


def prepare_params(params):
    """One-time, outside-jit param prep: fold affine scalars, transpose fc_w."""
    f32 = jnp.float32
    affine = jnp.stack([
        params["w1"] + params["wr1"], params["b1"] + params["br1"],
        params["w2"] + params["wr2"], params["b2"] + params["br2"],
    ]).astype(f32)                                     # (4,)
    return {
        "affine": affine,
        "fc_w_t": params["fc_w"].T.astype(f32),        # (72, 20)
        "fc_b": params["fc_b"].reshape(1, N_CLASS).astype(f32),
    }


def teacher_net_forward(x_nchw, prepped, *, batch_block=None):
    """x_nchw: (B, 1, H, W) float32 with H%4 == 0, W%4 == 0, (H//4)*(W//4) == 72."""
    B, C, H, W = x_nchw.shape
    assert C == 1 and H % 4 == 0 and W % 4 == 0
    Hp, Wq = H // 4, W // 4
    F = Hp * Wq
    assert F == 72, "TeacherNet requires (H/4)*(W/4) == 72 for .view(-1, 72)"

    # Batch tiling: whole batch in one block while B is tiny; for large B pass
    # batch_block as a multiple of 8 to shard across TensorCores (v7x).
    bb = B if batch_block is None else batch_block
    assert B % bb == 0 and (bb == B or bb % 8 == 0)
    grid = (B // bb,)

    # Glue (plain JAX, fused into the same jit): decompose the nested 2x2
    # pooling windows and collapse (Hp, Wq) into a lane-dense 72-wide axis.
    xw = x_nchw.reshape(B, Hp, 2, 2, Wq, 2, 2)          # b, p, ei, di, q, ej, dj
    xw = jnp.transpose(xw, (2, 3, 5, 6, 0, 1, 4))       # ei, di, ej, dj, b, p, q
    xw = xw.reshape(16, B, F).astype(jnp.float32)       # k, b, 72

    probs = pl.pallas_call(
        _teacher_fused_kernel,
        out_shape=jax.ShapeDtypeStruct((B, N_CLASS), jnp.float32),
        grid_spec=pltpu.PrefetchScalarGridSpec(
            num_scalar_prefetch=1,                      # affine scalars -> SMEM
            grid=grid,
            in_specs=[
                pl.BlockSpec((16, bb, F), lambda i, affine: (0, i, 0)),
                pl.BlockSpec((F, N_CLASS), lambda i, affine: (0, 0)),
                pl.BlockSpec((1, N_CLASS), lambda i, affine: (0, 0)),
            ],
            out_specs=pl.BlockSpec((bb, N_CLASS), lambda i, affine: (i, 0)),
        ),
        compiler_params=pltpu.CompilerParams(
            dimension_semantics=("parallel",)),
    )(prepped["affine"], xw, prepped["fc_w_t"], prepped["fc_b"])

    return probs


def init_params(key):
    ks = jax.random.split(key, 10)
    return {
        # 1x1, 1->1 channel convs: scalar weight + scalar bias each.
        "w1":  jax.random.normal(ks[0], ()) * 0.5,
        "b1":  jax.random.normal(ks[1], ()) * 0.1,
        "wr1": jax.random.normal(ks[2], ()) * 0.5,
        "br1": jax.random.normal(ks[3], ()) * 0.1,
        "w2":  jax.random.normal(ks[4], ()) * 0.5,
        "b2":  jax.random.normal(ks[5], ()) * 0.1,
        "wr2": jax.random.normal(ks[6], ()) * 0.5,
        "br2": jax.random.normal(ks[7], ()) * 0.1,
        # nn.Linear(72, 20): weight (20, 72), bias (20,)
        "fc_w": jax.random.normal(ks[8], (N_CLASS, 72)) * (1.0 / jnp.sqrt(72.0)),
        "fc_b": jax.random.normal(ks[9], (N_CLASS,)) * 0.1,
    }


def _reference_forward(x, params):
    """Pure-JAX reference matching the PyTorch forward."""
    B, _, H, W = x.shape
    a1 = params["w1"] + params["wr1"]
    c1 = params["b1"] + params["br1"]
    a2 = params["w2"] + params["wr2"]
    c2 = params["b2"] + params["br2"]
    y = jnp.maximum(a1 * x + c1, 0.0)
    y = y.reshape(B, 1, H // 2, 2, W // 2, 2).max(axis=(3, 5))
    y = jnp.maximum(a2 * y + c2, 0.0)
    y = y.reshape(B, 1, H // 4, 2, W // 4, 2).max(axis=(3, 5))
    feat = y.reshape(B, 72)
    logits = jnp.dot(feat, params["fc_w"].T,
                     precision=jax.lax.Precision.HIGHEST) + params["fc_b"]
    logits = logits - logits.max(axis=-1, keepdims=True)
    e = jnp.exp(logits)
    return e / e.sum(axis=-1, keepdims=True)


if __name__ == "__main__":
    key = jax.random.PRNGKey(0)
    pkey, xkey = jax.random.split(key)
    params = init_params(pkey)
    prepped = prepare_params(params)          # folded scalars + fc_w.T, outside jit

    # (H/4)*(W/4) = 8*9 = 72, as required by .view(-1, 72).
    B, H, W = 2, 32, 36
    x = jax.random.normal(xkey, (B, 1, H, W), dtype=jnp.float32)

    probs = jax.jit(teacher_net_forward)(x, prepped)
    probs = jax.block_until_ready(probs)

    assert probs.shape == (B, N_CLASS)
    # softmax rows sum to 1 (exact reciprocal used in-kernel)
    assert bool(jnp.allclose(jnp.sum(probs, axis=1), 1.0, atol=1e-5))
    # end-to-end check against the pure-JAX reference of the PyTorch forward
    ref = _reference_forward(x, params)
    assert bool(jnp.allclose(probs, ref, atol=1e-4)), "mismatch vs reference"
    print("KERNEL_OK")
</pallas_src>

<mosaic_0001>
module attributes {stable_mosaic.version = 11 : i64} {
  func.func @_teacher_fused_kernel(%arg0: i32, %arg1: memref<4xf32, #tpu.memory_space<smem>>, %arg2: memref<16x2x72xf32, #tpu.memory_space<vmem>>, %arg3: memref<72x20xf32, #tpu.memory_space<vmem>>, %arg4: memref<1x20xf32, #tpu.memory_space<vmem>>, %arg5: memref<2x20xf32, #tpu.memory_space<vmem>>) attributes {dimension_semantics = [#tpu.dimension_semantics<parallel>], iteration_bounds = array<i64: 1>, scalar_prefetch = 1 : i64, scratch_operands = 0 : i64, tpu.core_type = #tpu.core_type<tc>, window_params = [{transform_indices = @transform_0, window_bounds = array<i64: 16, 2, 72>}, {pipeline_mode = #tpu.pipeline_mode<synchronous>, transform_indices = @transform_1, window_bounds = array<i64: 72, 20>}, {pipeline_mode = #tpu.pipeline_mode<synchronous>, transform_indices = @transform_2, window_bounds = array<i64: 1, 20>}, {transform_indices = @transform_3, window_bounds = array<i64: 2, 20>}]} {
    %c0 = arith.constant 0 : index
    %0 = memref.load %arg1[%c0] : memref<4xf32, #tpu.memory_space<smem>>
    %c1 = arith.constant 1 : index
    %1 = memref.load %arg1[%c1] : memref<4xf32, #tpu.memory_space<smem>>
    %c2 = arith.constant 2 : index
    %2 = memref.load %arg1[%c2] : memref<4xf32, #tpu.memory_space<smem>>
    %c3 = arith.constant 3 : index
    %3 = memref.load %arg1[%c3] : memref<4xf32, #tpu.memory_space<smem>>
    %c0_0 = arith.constant 0 : index
    %c0_1 = arith.constant 0 : index
    %c0_2 = arith.constant 0 : index
    %4 = vector.load %arg2[%c0_0, %c0_1, %c0_2] : memref<16x2x72xf32, #tpu.memory_space<vmem>>, vector<1x2x72xf32>
    %5 = vector.shape_cast %4 : vector<1x2x72xf32> to vector<2x72xf32>
    %6 = vector.broadcast %0 : f32 to vector<2x72xf32>
    %7 = arith.mulf %6, %5 : vector<2x72xf32>
    %8 = vector.broadcast %1 : f32 to vector<2x72xf32>
    %9 = arith.addf %7, %8 : vector<2x72xf32>
    %cst = arith.constant 0.000000e+00 : f32
    %10 = vector.broadcast %cst : f32 to vector<2x72xf32>
    %11 = arith.maximumf %9, %10 : vector<2x72xf32>
    %c1_3 = arith.constant 1 : index
    %c0_4 = arith.constant 0 : index
    %c0_5 = arith.constant 0 : index
    %12 = vector.load %arg2[%c1_3, %c0_4, %c0_5] : memref<16x2x72xf32, #tpu.memory_space<vmem>>, vector<1x2x72xf32>
    %13 = vector.shape_cast %12 : vector<1x2x72xf32> to vector<2x72xf32>
    %14 = vector.broadcast %0 : f32 to vector<2x72xf32>
    %15 = arith.mulf %14, %13 : vector<2x72xf32>
    %16 = vector.broadcast %1 : f32 to vector<2x72xf32>
    %17 = arith.addf %15, %16 : vector<2x72xf32>
    %cst_6 = arith.constant 0.000000e+00 : f32
    %18 = vector.broadcast %cst_6 : f32 to vector<2x72xf32>
    %19 = arith.maximumf %17, %18 : vector<2x72xf32>
    %20 = arith.maximumf %11, %19 : vector<2x72xf32>
    %c4 = arith.constant 4 : index
    %c0_7 = arith.constant 0 : index
    %c0_8 = arith.constant 0 : index
    %21 = vector.load %arg2[%c4, %c0_7, %c0_8] : memref<16x2x72xf32, #tpu.memory_space<vmem>>, vector<1x2x72xf32>
    %22 = vector.shape_cast %21 : vector<1x2x72xf32> to vector<2x72xf32>
    %23 = vector.broadcast %0 : f32 to vector<2x72xf32>
    %24 = arith.mulf %23, %22 : vector<2x72xf32>
    %25 = vector.broadcast %1 : f32 to vector<2x72xf32>
    %26 = arith.addf %24, %25 : vector<2x72xf32>
    %cst_9 = arith.constant 0.000000e+00 : f32
    %27 = vector.broadcast %cst_9 : f32 to vector<2x72xf32>
    %28 = arith.maximumf %26, %27 : vector<2x72xf32>
    %29 = arith.maximumf %20, %28 : vector<2x72xf32>
    %c5 = arith.constant 5 : index
    %c0_10 = arith.constant 0 : index
    %c0_11 = arith.constant 0 : index
    %30 = vector.load %arg2[%c5, %c0_10, %c0_11] : memref<16x2x72xf32, #tpu.memory_space<vmem>>, vector<1x2x72xf32>
    %31 = vector.shape_cast %30 : vector<1x2x72xf32> to vector<2x72xf32>
    %32 = vector.broadcast %0 : f32 to vector<2x72xf32>
    %33 = arith.mulf %32, %31 : vector<2x72xf32>
    %34 = vector.broadcast %1 : f32 to vector<2x72xf32>
    %35 = arith.addf %33, %34 : vector<2x72xf32>
    %cst_12 = arith.constant 0.000000e+00 : f32
    %36 = vector.broadcast %cst_12 : f32 to vector<2x72xf32>
    %37 = arith.maximumf %35, %36 : vector<2x72xf32>
    %38 = arith.maximumf %29, %37 : vector<2x72xf32>
    %39 = vector.broadcast %2 : f32 to vector<2x72xf32>
    %40 = arith.mulf %39, %38 : vector<2x72xf32>
    %41 = vector.broadcast %3 : f32 to vector<2x72xf32>
    %42 = arith.addf %40, %41 : vector<2x72xf32>
    %cst_13 = arith.constant 0.000000e+00 : f32
    %43 = vector.broadcast %cst_13 : f32 to vector<2x72xf32>
    %44 = arith.maximumf %42, %43 : vector<2x72xf32>
    %c2_14 = arith.constant 2 : index
    %c0_15 = arith.constant 0 : index
    %c0_16 = arith.constant 0 : index
    %45 = vector.load %arg2[%c2_14, %c0_15, %c0_16] : memref<16x2x72xf32, #tpu.memory_space<vmem>>, vector<1x2x72xf32>
    %46 = vector.shape_cast %45 : vector<1x2x72xf32> to vector<2x72xf32>
    %47 = vector.broadcast %0 : f32 to vector<2x72xf32>
    %48 = arith.mulf %47, %46 : vector<2x72xf32>
    %49 = vector.broadcast %1 : f32 to vector<2x72xf32>
    %50 = arith.addf %48, %49 : vector<2x72xf32>
    %cst_17 = arith.constant 0.000000e+00 : f32
    %51 = vector.broadcast %cst_17 : f32 to vector<2x72xf32>
    %52 = arith.maximumf %50, %51 : vector<2x72xf32>
    %c3_18 = arith.constant 3 : index
    %c0_19 = arith.constant 0 : index
    %c0_20 = arith.constant 0 : index
    %53 = vector.load %arg2[%c3_18, %c0_19, %c0_20] : memref<16x2x72xf32, #tpu.memory_space<vmem>>, vector<1x2x72xf32>
    %54 = vector.shape_cast %53 : vector<1x2x72xf32> to vector<2x72xf32>
    %55 = vector.broadcast %0 : f32 to vector<2x72xf32>
    %56 = arith.mulf %55, %54 : vector<2x72xf32>
    %57 = vector.broadcast %1 : f32 to vector<2x72xf32>
    %58 = arith.addf %56, %57 : vector<2x72xf32>
    %cst_21 = arith.constant 0.000000e+00 : f32
    %59 = vector.broadcast %cst_21 : f32 to vector<2x72xf32>
    %60 = arith.maximumf %58, %59 : vector<2x72xf32>
    %61 = arith.maximumf %52, %60 : vector<2x72xf32>
    %c6 = arith.constant 6 : index
    %c0_22 = arith.constant 0 : index
    %c0_23 = arith.constant 0 : index
    %62 = vector.load %arg2[%c6, %c0_22, %c0_23] : memref<16x2x72xf32, #tpu.memory_space<vmem>>, vector<1x2x72xf32>
    %63 = vector.shape_cast %62 : vector<1x2x72xf32> to vector<2x72xf32>
    %64 = vector.broadcast %0 : f32 to vector<2x72xf32>
    %65 = arith.mulf %64, %63 : vector<2x72xf32>
    %66 = vector.broadcast %1 : f32 to vector<2x72xf32>
    %67 = arith.addf %65, %66 : vector<2x72xf32>
    %cst_24 = arith.constant 0.000000e+00 : f32
    %68 = vector.broadcast %cst_24 : f32 to vector<2x72xf32>
    %69 = arith.maximumf %67, %68 : vector<2x72xf32>
    %70 = arith.maximumf %61, %69 : vector<2x72xf32>
    %c7 = arith.constant 7 : index
    %c0_25 = arith.constant 0 : index
    %c0_26 = arith.constant 0 : index
    %71 = vector.load %arg2[%c7, %c0_25, %c0_26] : memref<16x2x72xf32, #tpu.memory_space<vmem>>, vector<1x2x72xf32>
    %72 = vector.shape_cast %71 : vector<1x2x72xf32> to vector<2x72xf32>
    %73 = vector.broadcast %0 : f32 to vector<2x72xf32>
    %74 = arith.mulf %73, %72 : vector<2x72xf32>
    %75 = vector.broadcast %1 : f32 to vector<2x72xf32>
    %76 = arith.addf %74, %75 : vector<2x72xf32>
    %cst_27 = arith.constant 0.000000e+00 : f32
    %77 = vector.broadcast %cst_27 : f32 to vector<2x72xf32>
    %78 = arith.maximumf %76, %77 : vector<2x72xf32>
    %79 = arith.maximumf %70, %78 : vector<2x72xf32>
    %80 = vector.broadcast %2 : f32 to vector<2x72xf32>
    %81 = arith.mulf %80, %79 : vector<2x72xf32>
    %82 = vector.broadcast %3 : f32 to vector<2x72xf32>
    %83 = arith.addf %81, %82 : vector<2x72xf32>
    %cst_28 = arith.constant 0.000000e+00 : f32
    %84 = vector.broadcast %cst_28 : f32 to vector<2x72xf32>
    %85 = arith.maximumf %83, %84 : vector<2x72xf32>
    %86 = arith.maximumf %44, %85 : vector<2x72xf32>
    %c8 = arith.constant 8 : index
    %c0_29 = arith.constant 0 : index
    %c0_30 = arith.constant 0 : index
    %87 = vector.load %arg2[%c8, %c0_29, %c0_30] : memref<16x2x72xf32, #tpu.memory_space<vmem>>, vector<1x2x72xf32>
    %88 = vector.shape_cast %87 : vector<1x2x72xf32> to vector<2x72xf32>
    %89 = vector.broadcast %0 : f32 to vector<2x72xf32>
    %90 = arith.mulf %89, %88 : vector<2x72xf32>
    %91 = vector.broadcast %1 : f32 to vector<2x72xf32>
    %92 = arith.addf %90, %91 : vector<2x72xf32>
    %cst_31 = arith.constant 0.000000e+00 : f32
    %93 = vector.broadcast %cst_31 : f32 to vector<2x72xf32>
    %94 = arith.maximumf %92, %93 : vector<2x72xf32>
    %c9 = arith.constant 9 : index
    %c0_32 = arith.constant 0 : index
    %c0_33 = arith.constant 0 : index
    %95 = vector.load %arg2[%c9, %c0_32, %c0_33] : memref<16x2x72xf32, #tpu.memory_space<vmem>>, vector<1x2x72xf32>
    %96 = vector.shape_cast %95 : vector<1x2x72xf32> to vector<2x72xf32>
    %97 = vector.broadcast %0 : f32 to vector<2x72xf32>
    %98 = arith.mulf %97, %96 : vector<2x72xf32>
    %99 = vector.broadcast %1 : f32 to vector<2x72xf32>
    %100 = arith.addf %98, %99 : vector<2x72xf32>
    %cst_34 = arith.constant 0.000000e+00 : f32
    %101 = vector.broadcast %cst_34 : f32 to vector<2x72xf32>
    %102 = arith.maximumf %100, %101 : vector<2x72xf32>
    %103 = arith.maximumf %94, %102 : vector<2x72xf32>
    %c12 = arith.constant 12 : index
    %c0_35 = arith.constant 0 : index
    %c0_36 = arith.constant 0 : index
    %104 = vector.load %arg2[%c12, %c0_35, %c0_36] : memref<16x2x72xf32, #tpu.memory_space<vmem>>, vector<1x2x72xf32>
    %105 = vector.shape_cast %104 : vector<1x2x72xf32> to vector<2x72xf32>
    %106 = vector.broadcast %0 : f32 to vector<2x72xf32>
    %107 = arith.mulf %106, %105 : vector<2x72xf32>
    %108 = vector.broadcast %1 : f32 to vector<2x72xf32>
    %109 = arith.addf %107, %108 : vector<2x72xf32>
    %cst_37 = arith.constant 0.000000e+00 : f32
    %110 = vector.broadcast %cst_37 : f32 to vector<2x72xf32>
    %111 = arith.maximumf %109, %110 : vector<2x72xf32>
    %112 = arith.maximumf %103, %111 : vector<2x72xf32>
    %c13 = arith.constant 13 : index
    %c0_38 = arith.constant 0 : index
    %c0_39 = arith.constant 0 : index
    %113 = vector.load %arg2[%c13, %c0_38, %c0_39] : memref<16x2x72xf32, #tpu.memory_space<vmem>>, vector<1x2x72xf32>
    %114 = vector.shape_cast %113 : vector<1x2x72xf32> to vector<2x72xf32>
    %115 = vector.broadcast %0 : f32 to vector<2x72xf32>
    %116 = arith.mulf %115, %114 : vector<2x72xf32>
    %117 = vector.broadcast %1 : f32 to vector<2x72xf32>
    %118 = arith.addf %116, %117 : vector<2x72xf32>
    %cst_40 = arith.constant 0.000000e+00 : f32
    %119 = vector.broadcast %cst_40 : f32 to vector<2x72xf32>
    %120 = arith.maximumf %118, %119 : vector<2x72xf32>
    %121 = arith.maximumf %112, %120 : vector<2x72xf32>
    %122 = vector.broadcast %2 : f32 to vector<2x72xf32>
    %123 = arith.mulf %122, %121 : vector<2x72xf32>
    %124 = vector.broadcast %3 : f32 to vector<2x72xf32>
    %125 = arith.addf %123, %124 : vector<2x72xf32>
    %cst_41 = arith.constant 0.000000e+00 : f32
    %126 = vector.broadcast %cst_41 : f32 to vector<2x72xf32>
    %127 = arith.maximumf %125, %126 : vector<2x72xf32>
    %128 = arith.maximumf %86, %127 : vector<2x72xf32>
    %c10 = arith.constant 10 : index
    %c0_42 = arith.constant 0 : index
    %c0_43 = arith.constant 0 : index
    %129 = vector.load %arg2[%c10, %c0_42, %c0_43] : memref<16x2x72xf32, #tpu.memory_space<vmem>>, vector<1x2x72xf32>
    %130 = vector.shape_cast %129 : vector<1x2x72xf32> to vector<2x72xf32>
    %131 = vector.broadcast %0 : f32 to vector<2x72xf32>
    %132 = arith.mulf %131, %130 : vector<2x72xf32>
    %133 = vector.broadcast %1 : f32 to vector<2x72xf32>
    %134 = arith.addf %132, %133 : vector<2x72xf32>
    %cst_44 = arith.constant 0.000000e+00 : f32
    %135 = vector.broadcast %cst_44 : f32 to vector<2x72xf32>
    %136 = arith.maximumf %134, %135 : vector<2x72xf32>
    %c11 = arith.constant 11 : index
    %c0_45 = arith.constant 0 : index
    %c0_46 = arith.constant 0 : index
    %137 = vector.load %arg2[%c11, %c0_45, %c0_46] : memref<16x2x72xf32, #tpu.memory_space<vmem>>, vector<1x2x72xf32>
    %138 = vector.shape_cast %137 : vector<1x2x72xf32> to vector<2x72xf32>
    %139 = vector.broadcast %0 : f32 to vector<2x72xf32>
    %140 = arith.mulf %139, %138 : vector<2x72xf32>
    %141 = vector.broadcast %1 : f32 to vector<2x72xf32>
    %142 = arith.addf %140, %141 : vector<2x72xf32>
    %cst_47 = arith.constant 0.000000e+00 : f32
    %143 = vector.broadcast %cst_47 : f32 to vector<2x72xf32>
    %144 = arith.maximumf %142, %143 : vector<2x72xf32>
    %145 = arith.maximumf %136, %144 : vector<2x72xf32>
    %c14 = arith.constant 14 : index
    %c0_48 = arith.constant 0 : index
    %c0_49 = arith.constant 0 : index
    %146 = vector.load %arg2[%c14, %c0_48, %c0_49] : memref<16x2x72xf32, #tpu.memory_space<vmem>>, vector<1x2x72xf32>
    %147 = vector.shape_cast %146 : vector<1x2x72xf32> to vector<2x72xf32>
    %148 = vector.broadcast %0 : f32 to vector<2x72xf32>
    %149 = arith.mulf %148, %147 : vector<2x72xf32>
    %150 = vector.broadcast %1 : f32 to vector<2x72xf32>
    %151 = arith.addf %149, %150 : vector<2x72xf32>
    %cst_50 = arith.constant 0.000000e+00 : f32
    %152 = vector.broadcast %cst_50 : f32 to vector<2x72xf32>
    %153 = arith.maximumf %151, %152 : vector<2x72xf32>
    %154 = arith.maximumf %145, %153 : vector<2x72xf32>
    %c15 = arith.constant 15 : index
    %c0_51 = arith.constant 0 : index
    %c0_52 = arith.constant 0 : index
    %155 = vector.load %arg2[%c15, %c0_51, %c0_52] : memref<16x2x72xf32, #tpu.memory_space<vmem>>, vector<1x2x72xf32>
    %156 = vector.shape_cast %155 : vector<1x2x72xf32> to vector<2x72xf32>
    %157 = vector.broadcast %0 : f32 to vector<2x72xf32>
    %158 = arith.mulf %157, %156 : vector<2x72xf32>
    %159 = vector.broadcast %1 : f32 to vector<2x72xf32>
    %160 = arith.addf %158, %159 : vector<2x72xf32>
    %cst_53 = arith.constant 0.000000e+00 : f32
    %161 = vector.broadcast %cst_53 : f32 to vector<2x72xf32>
    %162 = arith.maximumf %160, %161 : vector<2x72xf32>
    %163 = arith.maximumf %154, %162 : vector<2x72xf32>
    %164 = vector.broadcast %2 : f32 to vector<2x72xf32>
    %165 = arith.mulf %164, %163 : vector<2x72xf32>
    %166 = vector.broadcast %3 : f32 to vector<2x72xf32>
    %167 = arith.addf %165, %166 : vector<2x72xf32>
    %cst_54 = arith.constant 0.000000e+00 : f32
    %168 = vector.broadcast %cst_54 : f32 to vector<2x72xf32>
    %169 = arith.maximumf %167, %168 : vector<2x72xf32>
    %170 = arith.maximumf %128, %169 : vector<2x72xf32>
    %c0_55 = arith.constant 0 : index
    %c0_56 = arith.constant 0 : index
    %171 = vector.load %arg3[%c0_55, %c0_56] : memref<72x20xf32, #tpu.memory_space<vmem>>, vector<72x20xf32>
    %cst_57 = arith.constant dense<0.000000e+00> : vector<2x20xf32>
    %172 = tpu.matmul %170, %171, %cst_57 {dimension_numbers = #tpu.dot_dimension_numbers<[1], [0], [0], [1], [0, 0, 1, 1], [], []>} : vector<2x72xf32>, vector<72x20xf32>, vector<2x20xf32> -> vector<2x20xf32>
    %c0_58 = arith.constant 0 : index
    %c0_59 = arith.constant 0 : index
    %173 = vector.load %arg4[%c0_58, %c0_59] : memref<1x20xf32, #tpu.memory_space<vmem>>, vector<1x20xf32>
    %174 = vector.broadcast %173 : vector<1x20xf32> to vector<2x20xf32>
    %175 = arith.addf %172, %174 : vector<2x20xf32>
    %cst_60 = arith.constant dense<0xFF800000> : vector<2xf32>
    %176 = vector.multi_reduction <maximumf>, %175, %cst_60 [1] : vector<2x20xf32> to vector<2xf32>
    %177 = vector.shape_cast %176 : vector<2xf32> to vector<2x1xf32>
    %178 = vector.broadcast %177 : vector<2x1xf32> to vector<2x20xf32>
    %179 = arith.subf %175, %178 : vector<2x20xf32>
    %180 = math.exp %179 : vector<2x20xf32>
    %cst_61 = arith.constant dense<0.000000e+00> : vector<2xf32>
    %181 = vector.multi_reduction <add>, %180, %cst_61 [1] : vector<2x20xf32> to vector<2xf32>
    %182 = vector.shape_cast %181 : vector<2xf32> to vector<2x1xf32>
    %183 = tpu.reciprocal %182 : vector<2x1xf32> -> vector<2x1xf32>
    %184 = vector.broadcast %183 : vector<2x1xf32> to vector<2x20xf32>
    %185 = arith.mulf %180, %184 : vector<2x20xf32>
    %c0_62 = arith.constant 0 : index
    %c0_63 = arith.constant 0 : index
    %186 = vector.load %arg5[%c0_62, %c0_63] : memref<2x20xf32, #tpu.memory_space<vmem>>, vector<2x20xf32>
    tpu.vector_store %arg5[%c0_62, %c0_63], %185 {strides = array<i32>} : memref<2x20xf32, #tpu.memory_space<vmem>>, vector<2x20xf32>,
    return
  }
  func.func @transform_0(%arg0: i32, %arg1: memref<4xf32, #tpu.memory_space<smem>>) -> (i32, i32, i32) {
    %c0_i32 = arith.constant 0 : i32
    %c0_i32_0 = arith.constant 0 : i32
    %c0_i32_1 = arith.constant 0 : i32
    return %c0_i32, %arg0, %c0_i32_0 : i32, i32, i32
  }
  func.func @transform_1(%arg0: i32, %arg1: memref<4xf32, #tpu.memory_space<smem>>) -> (i32, i32) {
    %c0_i32 = arith.constant 0 : i32
    %c0_i32_0 = arith.constant 0 : i32
    %c0_i32_1 = arith.constant 0 : i32
    return %c0_i32, %c0_i32_0 : i32, i32
  }
  func.func @transform_2(%arg0: i32, %arg1: memref<4xf32, #tpu.memory_space<smem>>) -> (i32, i32) {
    %c0_i32 = arith.constant 0 : i32
    %c0_i32_0 = arith.constant 0 : i32
    %c0_i32_1 = arith.constant 0 : i32
    return %c0_i32, %c0_i32_0 : i32, i32
  }
  func.func @transform_3(%arg0: i32, %arg1: memref<4xf32, #tpu.memory_space<smem>>) -> (i32, i32) {
    %c0_i32 = arith.constant 0 : i32
    %c0_i32_0 = arith.constant 0 : i32
    return %arg0, %c0_i32 : i32, i32
  }
}

</mosaic_0001>

<llo_original>
// kernel: teacher_net_forward.1
$region0: #{teacher_net_forward.1}
  #allocation0 [shape = 'u32[]', space=smem, size = 0x4, offset = 0x4, fixed_abs, tag = 'smem constant byte address 0x4 - core index']
  #allocation1 [shape = 'u32[144,128]{1,0:T(1,128)}', space=vmem, size = 0x12000, scoped, tag = 'internal scratch']
  #allocation2 [shape = 's32[1]{0}', space=sflag, size = 0x4, scoped, tag = 'scoped memory for teacher_net_forward.1']
  #allocation3 [shape = 'u8[512]{0}', space=smem, size = 0x200, scoped, tag = 'prefetched SMEM operand 0']
  %s0 = inlined_call_operand.vmem [shape: f32[4], index: 0, kind: input, shape index: {}]
  %s1 = inlined_call_operand.vmem [shape: f32[16,2,72], index: 1, kind: input, shape index: {}]
  %s2 = inlined_call_operand.vmem [shape: f32[72,20], index: 2, kind: input, shape index: {}]
  %s3 = inlined_call_operand.vmem [shape: f32[1,20], index: 3, kind: input, shape index: {}]
  %s4 = inlined_call_operand.hbm [shape: f32[2,20], index: 4, kind: output, shape index: {}]
  %s5 = sld [smem:[#allocation0]]
  $region22: #{teacher_net_forward.1} parent=0
    _
  %s7 = ssub.s32 1, %s5
  %s8 = scalar_select 0, %s7, %s5
  %s9 = sshll.u32 %s0, 4
  %s10 = int_to_ptr.vmem [resolvable:$true] %s9
  %12 = dma.vmem_to_smem %s10, 16, [#allocation3], [#allocation2]
  %13 = dma.done [#allocation2], 16
  %14 = sfence
  $region1: #{teacher_net_forward.1} parent=0
    #allocation4 [shape = 'u8[1024]{0}', space=vmem, size = 0x400, scoped, tag = 'output window, operand 0, single buffered']
    #allocation5 [shape = 's32[1]{0}', space=sflag, size = 0x4, scoped, tag = 'scoped memory for teacher_net_forward.1']
    %15 = vsyncpa [#allocation5], 0
    // Predicated region
    $region2: #{teacher_net_forward.1} parent=1 // pred_check
      _
    $region3: #{teacher_net_forward.1} parent=1 // pred_check_branch
      %17 = sbr.rel (0) target = $region5
    $region4: #{teacher_net_forward.1} parent=1 // pred_region
      _
    $region5: #{teacher_net_forward.1} parent=1 // pred_fallthru
      _
    // Predicated region
    $region6: #{teacher_net_forward.1} parent=1 // pred_check
      _
    $region7: #{teacher_net_forward.1} parent=1 // pred_check_branch
      %19 = sbr.rel (0) target = $region9
    $region8: #{teacher_net_forward.1} parent=1 // pred_region
      _
    $region9: #{teacher_net_forward.1} parent=1 // pred_fallthru
      _
    // Predicated region
    $region10: #{teacher_net_forward.1} parent=1 // pred_check
      _
    $region11: #{teacher_net_forward.1} parent=1 // pred_check_branch
      %21 = sbr.rel (0) target = $region13
    $region12: #{teacher_net_forward.1} parent=1 // pred_region
      _
    $region13: #{teacher_net_forward.1} parent=1 // pred_fallthru
      _
    %s22 = sld [smem:[#allocation3]]
    %s23 = sld [smem:[#allocation3 + $0x1]]
    %s24 = sld [smem:[#allocation3 + $0x2]]
    %s25 = sld [smem:[#allocation3 + $0x3]]
    %v26 = vld [vmem:[%s1] sm:$0x3]
    %v27 = vstv %s22
    %v28 = vmul.f32 %v27, %v26
    %v29 = vstv %s23
    %v30 = vadd.f32 %v28, %v29
    %v31 = vmax.f32 %v30, 0.0
    %s32 = scalar_lea.vmem %s1, 2
    %v33 = vld [vmem:[%s32] sm:$0x3]
    %v34 = vmul.f32 %v27, %v33
    %v35 = vadd.f32 %v34, %v29
    %v36 = vmax.f32 %v35, 0.0
    %v37 = vmax.f32 %v31, %v36
    %s38 = scalar_lea.vmem %s1, 8
    %v39 = vld [vmem:[%s38] sm:$0x3]
    %v40 = vmul.f32 %v27, %v39
    %v41 = vadd.f32 %v40, %v29
    %v42 = vmax.f32 %v41, 0.0
    %v43 = vmax.f32 %v37, %v42
    %s44 = scalar_lea.vmem %s1, 10
    %v45 = vld [vmem:[%s44] sm:$0x3]
    %v46 = vmul.f32 %v27, %v45
    %v47 = vadd.f32 %v46, %v29
    %v48 = vmax.f32 %v47, 0.0
    %v49 = vmax.f32 %v43, %v48
    %v50 = vstv %s24
    %v51 = vmul.f32 %v50, %v49
    %v52 = vstv %s25
    %v53 = vadd.f32 %v51, %v52
    %v54 = vmax.f32 %v53, 0.0
    %s55 = scalar_lea.vmem %s1, 4
    %v56 = vld [vmem:[%s55] sm:$0x3]
    %v57 = vmul.f32 %v27, %v56
    %v58 = vadd.f32 %v57, %v29
    %v59 = vmax.f32 %v58, 0.0
    %s60 = scalar_lea.vmem %s1, 6
    %v61 = vld [vmem:[%s60] sm:$0x3]
    %v62 = vmul.f32 %v27, %v61
    %v63 = vadd.f32 %v62, %v29
    %v64 = vmax.f32 %v63, 0.0
    %v65 = vmax.f32 %v59, %v64
    %s66 = scalar_lea.vmem %s1, 12
    %v67 = vld [vmem:[%s66] sm:$0x3]
    %v68 = vmul.f32 %v27, %v67
    %v69 = vadd.f32 %v68, %v29
    %v70 = vmax.f32 %v69, 0.0
    %v71 = vmax.f32 %v65, %v70
    %s72 = scalar_lea.vmem %s1, 14
    %v73 = vld [vmem:[%s72] sm:$0x3]
    %v74 = vmul.f32 %v27, %v73
    %v75 = vadd.f32 %v74, %v29
    %v76 = vmax.f32 %v75, 0.0
    %v77 = vmax.f32 %v71, %v76
    %v78 = vmul.f32 %v50, %v77
    %v79 = vadd.f32 %v78, %v52
    %v80 = vmax.f32 %v79, 0.0
    %v81 = vmax.f32 %v54, %v80
    %s82 = scalar_lea.vmem %s1, 16
    %v83 = vld [vmem:[%s82] sm:$0x3]
    %v84 = vmul.f32 %v27, %v83
    %v85 = vadd.f32 %v84, %v29
    %v86 = vmax.f32 %v85, 0.0
    %s87 = scalar_lea.vmem %s1, 18
    %v88 = vld [vmem:[%s87] sm:$0x3]
    %v89 = vmul.f32 %v27, %v88
    %v90 = vadd.f32 %v89, %v29
    %v91 = vmax.f32 %v90, 0.0
    %v92 = vmax.f32 %v86, %v91
    %s93 = scalar_lea.vmem %s1, 24
    %v94 = vld [vmem:[%s93] sm:$0x3]
    %v95 = vmul.f32 %v27, %v94
    %v96 = vadd.f32 %v95, %v29
    %v97 = vmax.f32 %v96, 0.0
    %v98 = vmax.f32 %v92, %v97
    %s99 = scalar_lea.vmem %s1, 26
    %v100 = vld [vmem:[%s99] sm:$0x3]
    %v101 = vmul.f32 %v27, %v100
    %v102 = vadd.f32 %v101, %v29
    %v103 = vmax.f32 %v102, 0.0
    %v104 = vmax.f32 %v98, %v103
    %v105 = vmul.f32 %v50, %v104
    %v106 = vadd.f32 %v105, %v52
    %v107 = vmax.f32 %v106, 0.0
    %v108 = vmax.f32 %v81, %v107
    %s109 = scalar_lea.vmem %s1, 20
    %v110 = vld [vmem:[%s109] sm:$0x3]
    %v111 = vmul.f32 %v27, %v110
    %v112 = vadd.f32 %v111, %v29
    %v113 = vmax.f32 %v112, 0.0
    %s114 = scalar_lea.vmem %s1, 22
    %v115 = vld [vmem:[%s114] sm:$0x3]
    %v116 = vmul.f32 %v27, %v115
    %v117 = vadd.f32 %v116, %v29
    %v118 = vmax.f32 %v117, 0.0
    %v119 = vmax.f32 %v113, %v118
    %s120 = scalar_lea.vmem %s1, 28
    %v121 = vld [vmem:[%s120] sm:$0x3]
    %v122 = vmul.f32 %v27, %v121
    %v123 = vadd.f32 %v122, %v29
    %v124 = vmax.f32 %v123, 0.0
    %v125 = vmax.f32 %v119, %v124
    %s126 = scalar_lea.vmem %s1, 30
    %v127 = vld [vmem:[%s126] sm:$0x3]
    %v128 = vmul.f32 %v27, %v127
    %v129 = vadd.f32 %v128, %v29
    %v130 = vmax.f32 %v129, 0.0
    %v131 = vmax.f32 %v125, %v130
    %v132 = vmul.f32 %v50, %v131
    %v133 = vadd.f32 %v132, %v52
    %v134 = vmax.f32 %v133, 0.0
    %v135 = vmax.f32 %v108, %v134
    %v136 = vld [vmem:[%s2] sm:$0xff]
    %v137 = vld [vmem:[%s2 + $0x8] sm:$0xff]
    %v138 = vld [vmem:[%s2 + $0x10] sm:$0xff]
    %v139 = vld [vmem:[%s2 + $0x18] sm:$0xff]
    %v140 = vld [vmem:[%s2 + $0x20] sm:$0xff]
    %v141 = vld [vmem:[%s2 + $0x28] sm:$0xff]
    %v142 = vld [vmem:[%s2 + $0x30] sm:$0xff]
    %v143 = vld [vmem:[%s2 + $0x38] sm:$0xff]
    %v144 = vld [vmem:[%s2 + $0x40] sm:$0xff]
    %v145 = vld [vmem:[%s3] sm:$0x1]
    %v147 = vlaneseq
    %v148 = vshrl.u32 %v147, 7
    %v149 = vsub.s32 0, %v148
    %v150 = vrot.slane %v145, %v149
    %vm152 = vcmask 588800
    %v154 = vsel %vm152, %v135, 0
    %156 = vmatprep.subr.mxu0 0.0
    %157 = vmatpush1.msra.mxu0 %v136
    %158 = vmatprep.subr.mxu0 0.0
    %159 = vmatpush1.msra.mxu0 %v137
    %160 = vmatprep.subr.mxu0 0.0
    %161 = vmatpush1.msra.mxu0 %v138
    %162 = vmatprep.subr.mxu0 0.0
    %163 = vmatpush1.msra.mxu0 %v139
    %164 = vmatprep.subr.mxu0 0.0
    %165 = vmatpush1.msra.mxu0 %v140
    %166 = vmatprep.subr.mxu0 0.0
    %167 = vmatpush1.msra.mxu0 %v141
    %168 = vmatprep.subr.mxu0 0.0
    %169 = vmatpush1.msra.mxu0 %v142
    %170 = vmatprep.subr.mxu0 0.0
    %171 = vmatpush1.msra.mxu0 %v143
    %172 = vmatprep.subr.mxu0 0.0
    %173 = vmatpush1.msra.mxu0 %v144
    %174 = vmatprep.subr.mxu0 0.0
    %175 = vmatpush1.msra.mxu0 0.0
    %176 = vmatprep.subr.mxu0 0.0
    %177 = vmatpush1.msra.mxu0 0.0
    %178 = vmatprep.subr.mxu0 0.0
    %179 = vmatpush1.msra.mxu0 0.0
    %180 = vmatprep.subr.mxu0 0.0
    %181 = vmatpush1.msra.mxu0 0.0
    %182 = vmatprep.subr.mxu0 0.0
    %183 = vmatpush1.msra.mxu0 0.0
    %184 = vmatprep.subr.mxu0 0.0
    %185 = vmatpush1.msra.mxu0 0.0
    %186 = vmatprep.subr.mxu0 0.0
    %187 = vmatpush1.msra.mxu0 0.0
    %188 = vmatprep.subr.mxu0 0.0
    %189 = vmatpush1.msra.mxu0 0.0
    %190 = vmatprep.subr.mxu0 0.0
    %191 = vmatpush1.msra.mxu0 0.0
    %192 = vmatprep.subr.mxu0 0.0
    %193 = vmatpush1.msra.mxu0 0.0
    %194 = vmatprep.subr.mxu0 0.0
    %195 = vmatpush1.msra.mxu0 0.0
    %196 = vmatprep.subr.mxu0 0.0
    %197 = vmatpush1.msra.mxu0 0.0
    %198 = vmatprep.subr.mxu0 0.0
    %199 = vmatpush1.msra.mxu0 0.0
    %200 = vmatprep.subr.mxu0 0.0
    %201 = vmatpush1.msra.mxu0 0.0
    %202 = vmatprep.subr.mxu0 0.0
    %203 = vmatpush1.msra.mxu0 0.0
    %204 = vmatprep.subr.mxu0 0.0
    %205 = vmatpush1.msra.mxu0 0.0
    %206 = vmatprep.subr.mxu0 0.0
    %207 = vmatpush1.msra.mxu0 0.0
    %208 = vmatprep.subr.mxu0 0.0
    %209 = vmatpush1.msra.mxu0 0.0
    %210 = vmatprep.subr.mxu0 0.0
    %211 = vmatpush1.msra.mxu0 0.0
    %212 = vmatprep.subr.mxu0 0.0
    %213 = vmatpush1.msra.mxu0 0.0
    %214 = vmatprep.subr.mxu0 0.0
    %215 = vmatpush1.msra.mxu0 0.0
    %216 = vmatprep.subr.mxu0 0.0
    %217 = vmatpush1.msra.mxu0 0.0
    %218 = vmatprep.subr.mxu0 0.0
    %219 = vmatpush1.msra.mxu0 0.0
    %220 = vmatprep.mubr.f32.mxu0 0.0
    %221 = vmatmul.mubr.f32.gmra.mrb[0].mxu0 %v154
    %v222 = vpop.f32.mrb[0].mxu0
    %v223 = vadd.f32 %v150, %v222
    %v224 = vpop.f32.mrb[0].mxu0
    %225 = vdwg.mxu0
    %vm226 = vcmask 156672
    %v227 = vsel %vm226, %v223, -inf
    %228 = vmax.xlane.f32.xlu0 %v227
    %v229 = vpop.xlane.xlu0 %228
    %v230 = vsub.f32 %v223, %v229
    %v231 = vmul.f32 %v230, 1.442695
    %v232 = vpow.pop %v231
    %v233 = vsel %vm226, %v232, 0.0
    %234 = vadd.xlane.f32.xlu0 %v233
    %v235 = vpop.xlane.xlu0 %234
    %v236 = vrcp.pop %v235
    %v237 = vmul.f32 %v232, %v236
    %238 = vst.msk [vmem:[#allocation4] sm:$0x3] %vm226, %v237
    // Predicated region
    $region14: #{teacher_net_forward.1} parent=1 // pred_check
      _
    $region15: #{teacher_net_forward.1} parent=1 // pred_check_branch
      %240 = sbr.rel (0) target = $region17
    $region16: #{teacher_net_forward.1} parent=1 // pred_region
      %s242 = ssub.s32 32, 32
      %243 = vsyncadd [#allocation5], %s242
      %s245 = sshll.u32 [#allocation4], 4
      %s246 = int_to_ptr.vmem [resolvable:$true] %s245
      %248 = dma.vmem_to_hbm [thread:$0]  %s246, 32, %s4, [#allocation5]
    $region17: #{teacher_net_forward.1} parent=1 // pred_fallthru
      _
    // Predicated region
    $region18: #{teacher_net_forward.1} parent=1 // pred_check
      _
    $region19: #{teacher_net_forward.1} parent=1 // pred_check_branch
      %250 = sbr.rel (0) target = $region21
    $region20: #{teacher_net_forward.1} parent=1 // pred_region
      %251 = dma.done [#allocation5], 32
    $region21: #{teacher_net_forward.1} parent=1 // pred_fallthru
      _
    %252 = vsyncpa [#allocation5], 1

</llo_original>
